<compile_context>
chip_gen: v7x
topology: tpu7x:2x2x1
jax: 0.10.0
libtpu: 0.0.40
codegen_flags: <defaults>
</compile_context>

<pallas_src>
import jax
import jax.numpy as jnp
import numpy as np
from jax.experimental import pallas as pl
from jax.experimental.pallas import tpu as pltpu


# ----------------------------------------------------------------------------
# Fused kernel: linear layer + scalar threshold + mask compare, one invocation.
# Grid-less; every operand is a single whole-array VMEM block.
# ----------------------------------------------------------------------------
def fused_linear_mask_kernel(x_ref, wt_ref, b_ref, mask_ref, out_ref, gt_ref):
    x = x_ref[...]                                              # (B, F_in) f32
    out = jnp.dot(x, wt_ref[...],
                  preferred_element_type=jnp.float32) + b_ref[...]
    out_ref[...] = out                                          # (B, F_out)
    # out.sum(axis=1).mean() == out.sum() / B  -- valid ONLY because the whole
    # batch and all F_out columns live in this single (grid-less) block.
    thr = jnp.sum(out) / x.shape[0]
    # mask_ref is the (rows, 128) lane-dense view; int8 store is unmasked.
    gt_ref[...] = (mask_ref[...] > thr).astype(jnp.int8)


def _flatten_mask(mask):
    """Contiguous reshape of mask to a lane/sublane-dense 2-D (rows, 128) view."""
    total = int(np.prod(mask.shape))
    if total % 128 == 0:
        return mask.reshape(total // 128, 128)
    # Fallback for awkward sizes; still 2-D, last dim as long as possible.
    return mask.reshape(1, total)


@jax.jit
def _device_forward(x, wt, b2, mask2d):
    """Jitted device-side portion: one fused pallas_call, no host syncs."""
    B = x.shape[0]
    F_out = wt.shape[1]
    out, gt = pl.pallas_call(
        fused_linear_mask_kernel,
        out_shape=(
            jax.ShapeDtypeStruct((B, F_out), jnp.float32),
            jax.ShapeDtypeStruct(mask2d.shape, jnp.int8),
        ),
        in_specs=[
            pl.BlockSpec(memory_space=pltpu.VMEM),   # x
            pl.BlockSpec(memory_space=pltpu.VMEM),   # wt (pre-transposed)
            pl.BlockSpec(memory_space=pltpu.VMEM),   # bias row
            pl.BlockSpec(memory_space=pltpu.VMEM),   # mask, flattened (rows,128)
        ],
        out_specs=(
            pl.BlockSpec(memory_space=pltpu.VMEM),   # out
            pl.BlockSpec(memory_space=pltpu.VMEM),   # gt (int8, lane-dense)
        ),
    )(x, wt, b2, mask2d)
    return out, gt


def my_module_forward(x, mask, wt, b2):
    """x: (B, F_in); mask: (M0, M1, M2);
    wt: (F_in, F_out) pre-transposed weight; b2: (1, F_out) bias row."""
    mask2d = _flatten_mask(mask)
    out, gt = _device_forward(x, wt, b2, mask2d)

    # TODO(synk): torch.nonzero(as_tuple=True) has a data-dependent output
    # shape; extract indices on the host. Start the D2H of the small int8 map
    # asynchronously and only block on `gt`, never on `out`.
    if hasattr(gt, "copy_to_host_async"):
        gt.copy_to_host_async()
    gt_host = np.asarray(gt)                     # blocks on gt only
    flat_idx = np.flatnonzero(gt_host)           # C-order == original mask order
    hi_idx = np.unravel_index(flat_idx, mask.shape)
    return out, hi_idx


if __name__ == "__main__":
    # Small shapes consistent with the module: input (B, in_features),
    # Linear(in_features -> out_features), mask is a 3-D float tensor whose
    # flattened size is a multiple of 128 (lane-dense).
    B, F_IN, F_OUT = 16, 32, 8
    M0, M1, M2 = 4, 16, 128

    key = jax.random.PRNGKey(0)
    k_x, k_m, k_w, k_b = jax.random.split(key, 4)

    x = jax.random.uniform(k_x, (B, F_IN), dtype=jnp.float32)
    mask = jax.random.uniform(k_m, (M0, M1, M2), dtype=jnp.float32)

    # Deterministic parameter init (nn.Linear-style uniform bounds).
    bound = 1.0 / np.sqrt(F_IN)
    weight = jax.random.uniform(k_w, (F_OUT, F_IN), jnp.float32, -bound, bound)
    bias = jax.random.uniform(k_b, (F_OUT,), jnp.float32, -bound, bound)

    # Parameter prep, done ONCE at init time (off the per-call hot path).
    wt = jnp.asarray(weight.T)            # (F_in, F_out)
    b2 = bias.reshape(1, F_OUT)           # broadcast row

    out, hi_idx = my_module_forward(x, mask, wt, b2)
    jax.block_until_ready(out)

    # Reference check in plain JAX/numpy.
    out_ref = x @ weight.T + bias
    thr_ref = float(out_ref.sum(axis=1).mean())
    hi_ref = np.nonzero(np.asarray(mask) > thr_ref)
    assert np.allclose(np.asarray(out), np.asarray(out_ref), rtol=1e-5, atol=1e-5)
    assert len(hi_idx) == len(hi_ref)
    assert all(np.array_equal(np.asarray(a), np.asarray(b))
               for a, b in zip(hi_idx, hi_ref))

    print("KERNEL_OK")
</pallas_src>

<mosaic_0001>
module attributes {stable_mosaic.version = 11 : i64} {
  func.func @fused_linear_mask_kernel(%arg0: memref<16x32xf32, #tpu.memory_space<vmem>>, %arg1: memref<32x8xf32, #tpu.memory_space<vmem>>, %arg2: memref<1x8xf32, #tpu.memory_space<vmem>>, %arg3: memref<64x128xf32, #tpu.memory_space<vmem>>, %arg4: memref<16x8xf32, #tpu.memory_space<vmem>>, %arg5: memref<64x128xi8, #tpu.memory_space<vmem>>) attributes {dimension_semantics = [], scalar_prefetch = 0 : i64, scratch_operands = 0 : i64, tpu.core_type = #tpu.core_type<tc>} {
    %c0 = arith.constant 0 : index
    %c0_0 = arith.constant 0 : index
    %0 = vector.load %arg0[%c0, %c0_0] : memref<16x32xf32, #tpu.memory_space<vmem>>, vector<16x32xf32>
    %c0_1 = arith.constant 0 : index
    %c0_2 = arith.constant 0 : index
    %1 = vector.load %arg1[%c0_1, %c0_2] : memref<32x8xf32, #tpu.memory_space<vmem>>, vector<32x8xf32>
    %cst = arith.constant dense<0.000000e+00> : vector<16x8xf32>
    %2 = tpu.matmul %0, %1, %cst {dimension_numbers = #tpu.dot_dimension_numbers<[1], [0], [0], [1], [0, 0, 1, 1], [], []>} : vector<16x32xf32>, vector<32x8xf32>, vector<16x8xf32> -> vector<16x8xf32>
    %c0_3 = arith.constant 0 : index
    %c0_4 = arith.constant 0 : index
    %3 = vector.load %arg2[%c0_3, %c0_4] : memref<1x8xf32, #tpu.memory_space<vmem>>, vector<1x8xf32>
    %4 = vector.broadcast %3 : vector<1x8xf32> to vector<16x8xf32>
    %5 = arith.addf %2, %4 : vector<16x8xf32>
    %c0_5 = arith.constant 0 : index
    %c0_6 = arith.constant 0 : index
    %6 = vector.load %arg4[%c0_5, %c0_6] : memref<16x8xf32, #tpu.memory_space<vmem>>, vector<16x8xf32>
    tpu.vector_store %arg4[%c0_5, %c0_6], %5 {strides = array<i32>} : memref<16x8xf32, #tpu.memory_space<vmem>>, vector<16x8xf32>,
    %7 = vector.shape_cast %5 : vector<16x8xf32> to vector<1x16x8xf32>
    %cst_7 = arith.constant dense<0.000000e+00> : vector<1xf32>
    %8 = vector.multi_reduction <add>, %7, %cst_7 [1, 2] : vector<1x16x8xf32> to vector<1xf32>
    %9 = vector.shape_cast %8 : vector<1xf32> to vector<1x1x1xf32>
    %10 = vector.extract %9[0, 0, 0] : f32 from vector<1x1x1xf32>
    %cst_8 = arith.constant 1.600000e+01 : f32
    %11 = arith.divf %10, %cst_8 : f32
    %c0_9 = arith.constant 0 : index
    %c0_10 = arith.constant 0 : index
    %12 = vector.load %arg3[%c0_9, %c0_10] : memref<64x128xf32, #tpu.memory_space<vmem>>, vector<64x128xf32>
    %13 = vector.broadcast %11 : f32 to vector<64x128xf32>
    %14 = arith.cmpf ogt, %12, %13 : vector<64x128xf32>
    %15 = arith.extui %14 : vector<64x128xi1> to vector<64x128xi8>
    %c0_11 = arith.constant 0 : index
    %c0_12 = arith.constant 0 : index
    %16 = vector.load %arg5[%c0_11, %c0_12] : memref<64x128xi8, #tpu.memory_space<vmem>>, vector<64x128xi8>
    tpu.vector_store %arg5[%c0_11, %c0_12], %15 {strides = array<i32>} : memref<64x128xi8, #tpu.memory_space<vmem>>, vector<64x128xi8>,
    return
  }
}

</mosaic_0001>

<llo_original>
// kernel: _device_forward.1
$region0: #{_device_forward.1}
  #allocation0 [shape = 'u32[]', space=smem, size = 0x4, offset = 0x4, fixed_abs, tag = 'smem constant byte address 0x4 - core index']
  #allocation1 [shape = 'u32[144,128]{1,0:T(1,128)}', space=vmem, size = 0x12000, scoped, tag = 'internal scratch']
  %s0 = inlined_call_operand.vmem [shape: f32[16,32], index: 0, kind: input, shape index: {}]
  %s1 = inlined_call_operand.vmem [shape: f32[32,8], index: 1, kind: input, shape index: {}]
  %s2 = inlined_call_operand.vmem [shape: f32[1,8], index: 2, kind: input, shape index: {}]
  %s3 = inlined_call_operand.hbm [shape: f32[64,128], index: 3, kind: input, shape index: {}]
  %s4 = inlined_call_operand.vmem [shape: f32[16,8], index: 4, kind: output, shape index: {0}]
  %s5 = inlined_call_operand.hbm [shape: s8[64,128], index: 5, kind: output, shape index: {1}]
  %6 = xla_tuple %s4, %s5
  %s7 = sld [smem:[#allocation0]]
  $region38: #{_device_forward.1} parent=0
    _
  %s9 = ssub.s32 1, %s7
  %s10 = scalar_select 0, %s9, %s7
  $region1: #{_device_forward.1} parent=0
    #allocation2 [shape = 'u8[32768]{0}', space=vmem, size = 0x8000, scoped, tag = 'input window, operand 3, single buffered']
    #allocation3 [shape = 's32[1]{0}', space=sflag, size = 0x4, scoped, tag = 'scoped memory for _device_forward.1']
    #allocation4 [shape = 's32[1]{0}', space=sflag, size = 0x4, scoped, tag = 'scoped memory for _device_forward.1']
    #allocation5 [shape = 'u8[8192]{0}', space=vmem, size = 0x2000, scoped, tag = 'output window, operand 1, single buffered']
    %11 = vsyncpa [#allocation3], 0
    %12 = vsyncpa [#allocation4], 0
    // Predicated region
    $region2: #{_device_forward.1} parent=1 // pred_check
      _
    $region3: #{_device_forward.1} parent=1 // pred_check_branch
      %14 = sbr.rel (0) target = $region5
    $region4: #{_device_forward.1} parent=1 // pred_region
      _
    $region5: #{_device_forward.1} parent=1 // pred_fallthru
      _
    // Predicated region
    $region6: #{_device_forward.1} parent=1 // pred_check
      _
    $region7: #{_device_forward.1} parent=1 // pred_check_branch
      %16 = sbr.rel (0) target = $region9
    $region8: #{_device_forward.1} parent=1 // pred_region
      _
    $region9: #{_device_forward.1} parent=1 // pred_fallthru
      _
    // Predicated region
    $region10: #{_device_forward.1} parent=1 // pred_check
      _
    $region11: #{_device_forward.1} parent=1 // pred_check_branch
      %18 = sbr.rel (0) target = $region13
    $region12: #{_device_forward.1} parent=1 // pred_region
      _
    $region13: #{_device_forward.1} parent=1 // pred_fallthru
      _
    // Predicated region
    $region14: #{_device_forward.1} parent=1 // pred_check
      _
    $region15: #{_device_forward.1} parent=1 // pred_check_branch
      %20 = sbr.rel (0) target = $region17
    $region16: #{_device_forward.1} parent=1 // pred_region
      %s22 = ssub.s32 1024, 1024
      %23 = vsyncadd [#allocation3], %s22
      %s24 = sshll.u32 [#allocation2], 4
      %s25 = int_to_ptr.vmem [resolvable:$true] %s24
      %30 = dma.hbm_to_vmem [thread:$0]  %s3, 1024, %s25, [#allocation3], 128, 128, 8
    $region17: #{_device_forward.1} parent=1 // pred_fallthru
      _
    // Predicated region
    $region18: #{_device_forward.1} parent=1 // pred_check
      _
    $region19: #{_device_forward.1} parent=1 // pred_check_branch
      %32 = sbr.rel (0) target = $region21
    $region20: #{_device_forward.1} parent=1 // pred_region
      %33 = dma.done [#allocation3], 1024
    $region21: #{_device_forward.1} parent=1 // pred_fallthru
      _
    %v36 = vld [vmem:[%s0] sm:$0xff]
    %v37 = vld [vmem:[%s0 + $0x8] sm:$0xff]
    %v38 = vld [vmem:[%s1] sm:$0xff]
    %v39 = vld [vmem:[%s1 + $0x8] sm:$0xff]
    %v40 = vld [vmem:[%s1 + $0x10] sm:$0xff]
    %v41 = vld [vmem:[%s1 + $0x18] sm:$0xff]
    %v42 = vld [vmem:[%s2] sm:$0x1]
    %v44 = vlaneseq
    %v45 = vshrl.u32 %v44, 7
    %v46 = vsub.s32 0, %v45
    %v47 = vrot.slane %v42, %v46
    %vm49 = vcmask 261120
    %v51 = vsel %vm49, %v36, 0
    %v54 = vsel %vm49, %v37, 0
    %56 = vmatprep.subr.mxu0 0.0
    %57 = vmatpush1.msra.mxu0 %v38
    %58 = vmatprep.subr.mxu0 0.0
    %59 = vmatpush1.msra.mxu0 %v39
    %60 = vmatprep.subr.mxu0 0.0
    %61 = vmatpush1.msra.mxu0 %v40
    %62 = vmatprep.subr.mxu0 0.0
    %63 = vmatpush1.msra.mxu0 %v41
    %64 = vmatprep.subr.mxu0 0.0
    %65 = vmatpush1.msra.mxu0 0.0
    %66 = vmatprep.subr.mxu0 0.0
    %67 = vmatpush1.msra.mxu0 0.0
    %68 = vmatprep.subr.mxu0 0.0
    %69 = vmatpush1.msra.mxu0 0.0
    %70 = vmatprep.subr.mxu0 0.0
    %71 = vmatpush1.msra.mxu0 0.0
    %72 = vmatprep.subr.mxu0 0.0
    %73 = vmatpush1.msra.mxu0 0.0
    %74 = vmatprep.subr.mxu0 0.0
    %75 = vmatpush1.msra.mxu0 0.0
    %76 = vmatprep.subr.mxu0 0.0
    %77 = vmatpush1.msra.mxu0 0.0
    %78 = vmatprep.subr.mxu0 0.0
    %79 = vmatpush1.msra.mxu0 0.0
    %80 = vmatprep.subr.mxu0 0.0
    %81 = vmatpush1.msra.mxu0 0.0
    %82 = vmatprep.subr.mxu0 0.0
    %83 = vmatpush1.msra.mxu0 0.0
    %84 = vmatprep.subr.mxu0 0.0
    %85 = vmatpush1.msra.mxu0 0.0
    %86 = vmatprep.subr.mxu0 0.0
    %87 = vmatpush1.msra.mxu0 0.0
    %88 = vmatprep.subr.mxu0 0.0
    %89 = vmatpush1.msra.mxu0 0.0
    %90 = vmatprep.subr.mxu0 0.0
    %91 = vmatpush1.msra.mxu0 0.0
    %92 = vmatprep.subr.mxu0 0.0
    %93 = vmatpush1.msra.mxu0 0.0
    %94 = vmatprep.subr.mxu0 0.0
    %95 = vmatpush1.msra.mxu0 0.0
    %96 = vmatprep.subr.mxu0 0.0
    %97 = vmatpush1.msra.mxu0 0.0
    %98 = vmatprep.subr.mxu0 0.0
    %99 = vmatpush1.msra.mxu0 0.0
    %100 = vmatprep.subr.mxu0 0.0
    %101 = vmatpush1.msra.mxu0 0.0
    %102 = vmatprep.subr.mxu0 0.0
    %103 = vmatpush1.msra.mxu0 0.0
    %104 = vmatprep.subr.mxu0 0.0
    %105 = vmatpush1.msra.mxu0 0.0
    %106 = vmatprep.subr.mxu0 0.0
    %107 = vmatpush1.msra.mxu0 0.0
    %108 = vmatprep.subr.mxu0 0.0
    %109 = vmatpush1.msra.mxu0 0.0
    %110 = vmatprep.subr.mxu0 0.0
    %111 = vmatpush1.msra.mxu0 0.0
    %112 = vmatprep.subr.mxu0 0.0
    %113 = vmatpush1.msra.mxu0 0.0
    %114 = vmatprep.subr.mxu0 0.0
    %115 = vmatpush1.msra.mxu0 0.0
    %116 = vmatprep.subr.mxu0 0.0
    %117 = vmatpush1.msra.mxu0 0.0
    %118 = vmatprep.subr.mxu0 0.0
    %119 = vmatpush1.msra.mxu0 0.0
    %120 = vmatprep.mubr.f32.mxu0 0.0
    %121 = vmatmul.mubr.f32.gmra.mrb[0].mxu0 %v51
    %v122 = vpop.f32.mrb[0].mxu0
    %v123 = vadd.f32 %v47, %v122
    %v124 = vpop.f32.mrb[0].mxu0
    %125 = vmatprep.mubr.f32.mxu0 0.0
    %126 = vmatmul.mubr.f32.gmra.mrb[0].mxu0 %v54
    %v127 = vpop.f32.mrb[0].mxu0
    %v128 = vadd.f32 %v47, %v127
    %v129 = vpop.f32.mrb[0].mxu0
    %130 = vdwg.mxu0
    %vm131 = vcmask 64512
    %132 = vst.msk [vmem:[%s4] sm:$0xff] %vm131, %v123
    %133 = vst.msk [vmem:[%s4 + $0x8] sm:$0xff] %vm131, %v128
    %v134 = vsel %vm131, %v123, 0.0
    %v135 = vsel %vm131, %v128, 0.0
    %v136 = vadd.f32 %v134, %v135
    %137 = vadd.xlane.f32.xlu0 %v136
    %v138 = vpop.xlane.xlu0 %137
    %v139 = vrot.slane %v138, 4
    %v140 = vadd.f32 %v138, %v139
    %v141 = vrot.slane %v140, 2
    %v142 = vadd.f32 %v140, %v141
    %v143 = vrot.slane %v142, 1
    %v144 = vadd.f32 %v142, %v143
    %s145 = vtos %v144
    %v146 = vrcp.pop 16.0
    %s147 = vtos %v146
    %s148 = smul.f32 %s145, %s147
    %v149 = vld [vmem:[#allocation2] sm:$0xff]
    %v150 = vld [vmem:[#allocation2 + $0x8] sm:$0xff]
    %v151 = vld [vmem:[#allocation2 + $0x10] sm:$0xff]
    %v152 = vld [vmem:[#allocation2 + $0x18] sm:$0xff]
    %v153 = vld [vmem:[#allocation2 + $0x20] sm:$0xff]
    %v154 = vld [vmem:[#allocation2 + $0x28] sm:$0xff]
    %v155 = vld [vmem:[#allocation2 + $0x30] sm:$0xff]
    %v156 = vld [vmem:[#allocation2 + $0x38] sm:$0xff]
    %v157 = vstv %s148
    %vm158 = vcmp.gt.f32.partialorder %v149, %v157
    %vm159 = vcmp.gt.f32.partialorder %v150, %v157
    %vm160 = vcmp.gt.f32.partialorder %v151, %v157
    %vm161 = vcmp.gt.f32.partialorder %v152, %v157
    %vm162 = vcmp.gt.f32.partialorder %v153, %v157
    %vm163 = vcmp.gt.f32.partialorder %v154, %v157
    %vm164 = vcmp.gt.f32.partialorder %v155, %v157
    %vm165 = vcmp.gt.f32.partialorder %v156, %v157
    %vm166 = vmpackc.low %vm159, %vm158
    %vm167 = vmpackc.low %vm161, %vm160
    %vm168 = vmpackc.even %vm167, %vm166
    %vm169 = vmpackc.low %vm163, %vm162
    %vm170 = vmpackc.low %vm165, %vm164
    %vm171 = vmpackc.even %vm170, %vm169
    %v172 = vsel %vm168, 16843009, 0
    %v173 = vsel %vm171, 16843009, 0
    %174 = vst [vmem:[#allocation5] sm:$0xff] %v172
    %175 = vst [vmem:[#allocation5 + $0x8] sm:$0xff] %v173
    // Predicated region
    $region22: #{_device_forward.1} parent=1 // pred_check
      _
    $region23: #{_device_forward.1} parent=1 // pred_check_branch
      %177 = sbr.rel (0) target = $region25
    $region24: #{_device_forward.1} parent=1 // pred_region
      _
    $region25: #{_device_forward.1} parent=1 // pred_fallthru
      _
    // Predicated region
    $region26: #{_device_forward.1} parent=1 // pred_check
      _
    $region27: #{_device_forward.1} parent=1 // pred_check_branch
      %179 = sbr.rel (0) target = $region29
    $region28: #{_device_forward.1} parent=1 // pred_region
      %s181 = ssub.s32 256, 256
      %182 = vsyncadd [#allocation4], %s181
      %s183 = sshll.u32 [#allocation5], 4
      %s184 = int_to_ptr.vmem [resolvable:$true] %s183
      %189 = dma.vmem_to_hbm [thread:$0]  %s184, 256, %s5, [#allocation4], 128, 128, 8
    $region29: #{_device_forward.1} parent=1 // pred_fallthru
      _
    // Predicated region
    $region30: #{_device_forward.1} parent=1 // pred_check
      _
    $region31: #{_device_forward.1} parent=1 // pred_check_branch
      %191 = sbr.rel (0) target = $region33
    $region32: #{_device_forward.1} parent=1 // pred_region
      _
    $region33: #{_device_forward.1} parent=1 // pred_fallthru
      _
    // Predicated region
    $region34: #{_device_forward.1} parent=1 // pred_check
      _
    $region35: #{_device_forward.1} parent=1 // pred_check_branch
      %193 = sbr.rel (0) target = $region37
    $region36: #{_device_forward.1} parent=1 // pred_region
      %194 = dma.done [#allocation4], 256
    $region37: #{_device_forward.1} parent=1 // pred_fallthru
      _
    %195 = vsyncpa [#allocation3], 1
    %196 = vsyncpa [#allocation4], 1

</llo_original>
